<compile_context>
chip_gen: v5e
topology: v5e:2x2
jax: 0.10.0
libtpu: 0.0.40
codegen_flags: <defaults>
</compile_context>

<pallas_src>
import numpy as np
import jax
import jax.numpy as jnp
from jax.experimental import pallas as pl
from jax.experimental.pallas import tpu as pltpu


def _round_up(x: int, m: int) -> int:
    return ((x + m - 1) // m) * m


def _make_attention_loss_kernel(num_head: int, use_mean_form: bool):
    inv_h = 1.0 / float(num_head)

    def kernel(*refs):
        x_refs = refs[:num_head]
        o_ref = refs[num_head]
        acc_ref = refs[num_head + 1]

        k = pl.program_id(1)

        @pl.when(k == 0)
        def _init():
            acc_ref[...] = jnp.zeros_like(acc_ref)

        # Dense (tile_r, lanes) slabs per head; compute in f32.
        xs = [r[...].astype(jnp.float32) for r in x_refs]

        if use_mean_form:
            # Exact identity: sum_{i<j}(x_i-x_j)^2 = H * sum_i (x_i - mean)^2.
            s = xs[0]
            for x in xs[1:]:
                s = s + x
            m = s * jnp.float32(inv_h)
            total = None
            for x in xs:
                d = x - m
                sq = d * d
                total = sq if total is None else total + sq
        else:
            total = None
            for i in range(num_head - 1):
                for j in range(i + 1, num_head):
                    d = xs[i] - xs[j]
                    sq = d * d
                    total = sq if total is None else total + sq

        # Elementwise vector accumulation (pure VPU work, no per-step reduce).
        acc_ref[...] += total

        @pl.when(k == pl.num_programs(1) - 1)
        def _finalize():
            sblk = jnp.sum(acc_ref[...])                     # one XLU reduction
            o_ref[...] = jnp.broadcast_to(sblk, o_ref.shape)  # lane-dense store

    return kernel


def attention_loss(xs, *, target_block_bytes: int = 8 << 20):
    """xs: list/tuple of same-shape arrays (the per-head attention tensors)."""
    num_head = len(xs)
    if num_head <= 1:
        return jnp.float32(0.0)

    x0 = jnp.asarray(xs[0])
    n_elem = int(np.prod(x0.shape))
    n_pairs = num_head * (num_head - 1) // 2

    # For H >= 4 the mean-deviation form does less VALU work per element.
    use_mean_form = num_head >= 4
    if use_mean_form:
        scale = float(num_head) / (float(n_elem) * float(n_pairs))
    else:
        scale = 1.0 / (float(n_elem) * float(n_pairs))

    # Keep the native dtype for the HBM->VMEM transfer (bf16 halves traffic);
    # compute is always f32 inside the kernel.
    in_dt = x0.dtype
    if in_dt not in (jnp.dtype(jnp.float32), jnp.dtype(jnp.bfloat16)):
        in_dt = jnp.dtype(jnp.float32)
    itemsize = jnp.dtype(in_dt).itemsize
    sub = max(8, 32 // itemsize)  # sublane multiple: 8 for f32, 16 for bf16

    # Lane width (last dim): multiple of 128, as wide as cleanly possible.
    if n_elem % 512 == 0 and n_elem >= 8 * 512:
        lanes = 512
    elif n_elem % 256 == 0 and n_elem >= 8 * 256:
        lanes = 256
    elif n_elem % 128 == 0:
        lanes = 128
    else:
        lanes = 512 if n_elem >= 8 * 512 else 128  # ragged -> pad anyway
    rows = -(-n_elem // lanes)

    # Row tile sized so one grid step moves ~target_block_bytes of input
    # (summed over heads).
    bytes_per_row = num_head * lanes * itemsize
    tile_r = max(sub, (target_block_bytes // bytes_per_row) // sub * sub)
    tile_r = min(tile_r, _round_up(rows, sub))

    nb_total = -(-rows // tile_r)
    n_split = 2 if nb_total >= 2 else 1   # feed both TensorCores on v7x
    nb = -(-nb_total // n_split)
    rows_pad = n_split * nb * tile_r
    n_pad = rows_pad * lanes

    heads = []
    for x in xs:
        f = jnp.asarray(x, in_dt).reshape(-1)
        if n_pad != n_elem:
            # Identical zero pad on every head -> pairwise diffs are 0 there.
            f = jnp.pad(f, (0, n_pad - n_elem))
        heads.append(f.reshape(rows_pad, lanes))

    def in_index_map(p, k, _nb=nb):
        return (p * _nb + k, 0)

    kernel = _make_attention_loss_kernel(num_head, use_mean_form)

    out = pl.pallas_call(
        kernel,
        out_shape=jax.ShapeDtypeStruct((n_split, 8, 128), jnp.float32),
        grid_spec=pltpu.PrefetchScalarGridSpec(
            num_scalar_prefetch=0,
            grid=(n_split, nb),
            in_specs=[pl.BlockSpec((tile_r, lanes), in_index_map)
                      for _ in range(num_head)],
            out_specs=pl.BlockSpec((1, 8, 128), lambda p, k: (p, 0, 0)),
            scratch_shapes=[pltpu.VMEM((tile_r, lanes), jnp.float32)],
        ),
        compiler_params=pltpu.CompilerParams(
            dimension_semantics=("parallel", "arbitrary"),
            vmem_limit_bytes=32 << 20,
        ),
    )(*heads)

    # Each parallel slice broadcast its partial sum across its (8,128) tile;
    # take one lane per slice, combine and scale.
    return jnp.sum(out[:, 0, 0]) * jnp.float32(scale)


def attention_loss_ref(xs):
    """Pure-JAX reference (mirrors the PyTorch module)."""
    num_head = len(xs)
    if num_head <= 1:
        return jnp.float32(0.0)
    loss = jnp.float32(0.0)
    cnt = 0
    for i in range(num_head - 1):
        for j in range(i + 1, num_head):
            loss = loss + jnp.mean((jnp.asarray(xs[i], jnp.float32)
                                    - jnp.asarray(xs[j], jnp.float32)) ** 2)
            cnt += 1
    return loss / cnt


if __name__ == "__main__":
    # AttentionLoss has no parameters — nothing to initialize.
    key = jax.random.PRNGKey(0)

    # Test 1: 4 attention heads, each NCHW [2, 4, 16, 16] (tiles exactly).
    # Exercises the O(H) mean-deviation path.
    num_head = 4
    B, C, H, W = 2, 4, 16, 16
    keys = jax.random.split(key, num_head)
    xs = [jax.random.normal(k, (B, C, H, W), dtype=jnp.float32) for k in keys]
    loss = jax.block_until_ready(attention_loss(xs))
    ref = jax.block_until_ready(attention_loss_ref(xs))
    np.testing.assert_allclose(np.asarray(loss), np.asarray(ref),
                               rtol=5e-5, atol=1e-6)

    # Test 2: 3 heads (pairwise path) + ragged element count with tiny blocks
    # to exercise the multi-block grid, the 2-way parallel split and padding.
    keys2 = jax.random.split(jax.random.PRNGKey(1), 3)
    xs2 = [jax.random.normal(k, (2, 3, 24, 24), dtype=jnp.float32) for k in keys2]
    loss2 = jax.block_until_ready(attention_loss(xs2, target_block_bytes=8 << 10))
    ref2 = jax.block_until_ready(attention_loss_ref(xs2))
    np.testing.assert_allclose(np.asarray(loss2), np.asarray(ref2),
                               rtol=5e-5, atol=1e-6)

    # Test 3: 6 bf16 heads (bf16 HBM traffic, f32 compute, mean-form path).
    keys3 = jax.random.split(jax.random.PRNGKey(2), 6)
    xs3 = [jax.random.normal(k, (2, 2, 32, 64), dtype=jnp.bfloat16) for k in keys3]
    loss3 = jax.block_until_ready(attention_loss(xs3))
    ref3 = jax.block_until_ready(attention_loss_ref(xs3))
    np.testing.assert_allclose(np.asarray(loss3), np.asarray(ref3),
                               rtol=1e-4, atol=1e-6)

    print("KERNEL_OK")
</pallas_src>

<mosaic_0001>
module attributes {stable_mosaic.version = 11 : i64} {
  func.func @kernel(%arg0: i32, %arg1: i32, %arg2: memref<8x256xf32, #tpu.memory_space<vmem>>, %arg3: memref<8x256xf32, #tpu.memory_space<vmem>>, %arg4: memref<8x256xf32, #tpu.memory_space<vmem>>, %arg5: memref<8x256xf32, #tpu.memory_space<vmem>>, %arg6: memref<1x8x128xf32, #tpu.memory_space<vmem>>, %arg7: memref<8x256xf32, #tpu.memory_space<vmem>>) attributes {dimension_semantics = [#tpu.dimension_semantics<parallel>, #tpu.dimension_semantics<arbitrary>], iteration_bounds = array<i64: 1, 1>, scalar_prefetch = 0 : i64, scratch_operands = 1 : i64, tpu.core_type = #tpu.core_type<tc>, window_params = [{transform_indices = @transform_0, window_bounds = array<i64: 8, 256>}, {transform_indices = @transform_1, window_bounds = array<i64: 8, 256>}, {transform_indices = @transform_2, window_bounds = array<i64: 8, 256>}, {transform_indices = @transform_3, window_bounds = array<i64: 8, 256>}, {transform_indices = @transform_4, window_bounds = array<i64: 1, 8, 128>}]} {
    %c0_i32 = arith.constant 0 : i32
    %0 = arith.cmpi eq, %arg1, %c0_i32 : i32
    %1 = arith.extui %0 : i1 to i32
    %c0_i32_0 = arith.constant 0 : i32
    %2 = arith.cmpi ne, %1, %c0_i32_0 : i32
    scf.if %2 {
      %cst_14 = arith.constant 0.000000e+00 : f32
      %29 = vector.broadcast %cst_14 : f32 to vector<8x256xf32>
      %c0_15 = arith.constant 0 : index
      %c0_16 = arith.constant 0 : index
      %30 = vector.load %arg7[%c0_15, %c0_16] : memref<8x256xf32, #tpu.memory_space<vmem>>, vector<8x256xf32>
      tpu.vector_store %arg7[%c0_15, %c0_16], %29 {strides = array<i32>} : memref<8x256xf32, #tpu.memory_space<vmem>>, vector<8x256xf32>,
    } else {
    }
    %c0 = arith.constant 0 : index
    %c0_1 = arith.constant 0 : index
    %3 = vector.load %arg2[%c0, %c0_1] : memref<8x256xf32, #tpu.memory_space<vmem>>, vector<8x256xf32>
    %c0_2 = arith.constant 0 : index
    %c0_3 = arith.constant 0 : index
    %4 = vector.load %arg3[%c0_2, %c0_3] : memref<8x256xf32, #tpu.memory_space<vmem>>, vector<8x256xf32>
    %c0_4 = arith.constant 0 : index
    %c0_5 = arith.constant 0 : index
    %5 = vector.load %arg4[%c0_4, %c0_5] : memref<8x256xf32, #tpu.memory_space<vmem>>, vector<8x256xf32>
    %c0_6 = arith.constant 0 : index
    %c0_7 = arith.constant 0 : index
    %6 = vector.load %arg5[%c0_6, %c0_7] : memref<8x256xf32, #tpu.memory_space<vmem>>, vector<8x256xf32>
    %7 = arith.addf %3, %4 : vector<8x256xf32>
    %8 = arith.addf %7, %5 : vector<8x256xf32>
    %9 = arith.addf %8, %6 : vector<8x256xf32>
    %cst = arith.constant 2.500000e-01 : f32
    %10 = vector.broadcast %cst : f32 to vector<8x256xf32>
    %11 = arith.mulf %9, %10 : vector<8x256xf32>
    %12 = arith.subf %3, %11 : vector<8x256xf32>
    %13 = arith.mulf %12, %12 : vector<8x256xf32>
    %14 = arith.subf %4, %11 : vector<8x256xf32>
    %15 = arith.mulf %14, %14 : vector<8x256xf32>
    %16 = arith.addf %13, %15 : vector<8x256xf32>
    %17 = arith.subf %5, %11 : vector<8x256xf32>
    %18 = arith.mulf %17, %17 : vector<8x256xf32>
    %19 = arith.addf %16, %18 : vector<8x256xf32>
    %20 = arith.subf %6, %11 : vector<8x256xf32>
    %21 = arith.mulf %20, %20 : vector<8x256xf32>
    %22 = arith.addf %19, %21 : vector<8x256xf32>
    %c0_8 = arith.constant 0 : index
    %c0_9 = arith.constant 0 : index
    %23 = vector.load %arg7[%c0_8, %c0_9] : memref<8x256xf32, #tpu.memory_space<vmem>>, vector<8x256xf32>
    %24 = arith.addf %23, %22 : vector<8x256xf32>
    %c0_10 = arith.constant 0 : index
    %c0_11 = arith.constant 0 : index
    %25 = vector.load %arg7[%c0_10, %c0_11] : memref<8x256xf32, #tpu.memory_space<vmem>>, vector<8x256xf32>
    tpu.vector_store %arg7[%c0_10, %c0_11], %24 {strides = array<i32>} : memref<8x256xf32, #tpu.memory_space<vmem>>, vector<8x256xf32>,
    %c0_i32_12 = arith.constant 0 : i32
    %26 = arith.cmpi eq, %arg1, %c0_i32_12 : i32
    %27 = arith.extui %26 : i1 to i32
    %c0_i32_13 = arith.constant 0 : i32
    %28 = arith.cmpi ne, %27, %c0_i32_13 : i32
    scf.if %28 {
      %c0_14 = arith.constant 0 : index
      %c0_15 = arith.constant 0 : index
      %29 = vector.load %arg7[%c0_14, %c0_15] : memref<8x256xf32, #tpu.memory_space<vmem>>, vector<8x256xf32>
      %30 = vector.shape_cast %29 : vector<8x256xf32> to vector<1x8x256xf32>
      %cst_16 = arith.constant dense<0.000000e+00> : vector<1xf32>
      %31 = vector.multi_reduction <add>, %30, %cst_16 [1, 2] : vector<1x8x256xf32> to vector<1xf32>
      %32 = vector.shape_cast %31 : vector<1xf32> to vector<1x1x1xf32>
      %33 = vector.extract %32[0, 0, 0] : f32 from vector<1x1x1xf32>
      %34 = vector.broadcast %33 : f32 to vector<1x8x128xf32>
      %c0_17 = arith.constant 0 : index
      %c0_18 = arith.constant 0 : index
      %c0_19 = arith.constant 0 : index
      %35 = vector.load %arg6[%c0_17, %c0_18, %c0_19] : memref<1x8x128xf32, #tpu.memory_space<vmem>>, vector<1x8x128xf32>
      tpu.vector_store %arg6[%c0_17, %c0_18, %c0_19], %34 {strides = array<i32>} : memref<1x8x128xf32, #tpu.memory_space<vmem>>, vector<1x8x128xf32>,
    } else {
    }
    return
  }
  func.func @transform_0(%arg0: i32, %arg1: i32) -> (i32, i32) {
    %c1_i32 = arith.constant 1 : i32
    %0 = arith.muli %arg0, %c1_i32 : i32
    %1 = arith.addi %0, %arg1 : i32
    %c0_i32 = arith.constant 0 : i32
    %c0_i32_0 = arith.constant 0 : i32
    return %1, %c0_i32 : i32, i32
  }
  func.func @transform_1(%arg0: i32, %arg1: i32) -> (i32, i32) {
    %c1_i32 = arith.constant 1 : i32
    %0 = arith.muli %arg0, %c1_i32 : i32
    %1 = arith.addi %0, %arg1 : i32
    %c0_i32 = arith.constant 0 : i32
    %c0_i32_0 = arith.constant 0 : i32
    return %1, %c0_i32 : i32, i32
  }
  func.func @transform_2(%arg0: i32, %arg1: i32) -> (i32, i32) {
    %c1_i32 = arith.constant 1 : i32
    %0 = arith.muli %arg0, %c1_i32 : i32
    %1 = arith.addi %0, %arg1 : i32
    %c0_i32 = arith.constant 0 : i32
    %c0_i32_0 = arith.constant 0 : i32
    return %1, %c0_i32 : i32, i32
  }
  func.func @transform_3(%arg0: i32, %arg1: i32) -> (i32, i32) {
    %c1_i32 = arith.constant 1 : i32
    %0 = arith.muli %arg0, %c1_i32 : i32
    %1 = arith.addi %0, %arg1 : i32
    %c0_i32 = arith.constant 0 : i32
    %c0_i32_0 = arith.constant 0 : i32
    return %1, %c0_i32 : i32, i32
  }
  func.func @transform_4(%arg0: i32, %arg1: i32) -> (i32, i32, i32) {
    %c0_i32 = arith.constant 0 : i32
    %c0_i32_0 = arith.constant 0 : i32
    %c0_i32_1 = arith.constant 0 : i32
    return %arg0, %c0_i32, %c0_i32_0 : i32, i32, i32
  }
}

</mosaic_0001>

<llo_original>
// kernel: tpu_custom_call.1
$region0: #{tpu_custom_call.1}
  #allocation0 [shape = 'u32[]', space=smem, size = 0x4, offset = 0x4, fixed_abs, tag = 'smem constant byte address 0x4 - core index']
  #allocation1 [shape = 'u32[72,128]{1,0:T(1,128)}', space=vmem, size = 0x9000, scoped, tag = 'internal scratch']
  #allocation2 [shape = 'f32[8,256]{1,0:T(8,128)}', space=vmem, size = 0x2000, scoped, tag = 'scratch operand']
  %s0 = inlined_call_operand.hbm [shape: f32[8,256], index: 0, kind: input, shape index: {}]
  %s1 = inlined_call_operand.hbm [shape: f32[8,256], index: 1, kind: input, shape index: {}]
  %s2 = inlined_call_operand.hbm [shape: f32[8,256], index: 2, kind: input, shape index: {}]
  %s3 = inlined_call_operand.hbm [shape: f32[8,256], index: 3, kind: input, shape index: {}]
  %s4 = inlined_call_operand.hbm [shape: f32[1,8,128], index: 4, kind: output, shape index: {}]
  %s5 = sld [smem:[#allocation0]]
  $region50: #{tpu_custom_call.1} parent=0
    _
  %s7 = ssub.s32 1, %s5
  %s8 = scalar_select 0, %s7, %s5
  $region1: #{tpu_custom_call.1} parent=0
    #allocation3 [shape = 'u8[8192]{0}', space=vmem, size = 0x2000, scoped, tag = 'input window, operand 0, single buffered']
    #allocation4 [shape = 's32[1]{0}', space=sflag, size = 0x4, scoped, tag = 'scoped memory for tpu_custom_call.1']
    #allocation5 [shape = 's32[1]{0}', space=sflag, size = 0x4, scoped, tag = 'scoped memory for tpu_custom_call.1']
    #allocation6 [shape = 'u8[8192]{0}', space=vmem, size = 0x2000, scoped, tag = 'input window, operand 1, single buffered']
    #allocation7 [shape = 's32[1]{0}', space=sflag, size = 0x4, scoped, tag = 'scoped memory for tpu_custom_call.1']
    #allocation8 [shape = 'u8[8192]{0}', space=vmem, size = 0x2000, scoped, tag = 'input window, operand 2, single buffered']
    #allocation9 [shape = 'u8[8192]{0}', space=vmem, size = 0x2000, scoped, tag = 'input window, operand 3, single buffered']
    #allocation10 [shape = 's32[1]{0}', space=sflag, size = 0x4, scoped, tag = 'scoped memory for tpu_custom_call.1']
    #allocation11 [shape = 'u8[4096]{0}', space=vmem, size = 0x1000, scoped, tag = 'output window, operand 0, single buffered']
    %9 = vsyncpa [#allocation4], 0
    %10 = vsyncpa [#allocation7], 0
    %11 = vsyncpa [#allocation10], 0
    %12 = vsyncpa [#allocation5], 0
    // Predicated region
    $region2: #{tpu_custom_call.1} parent=1 // pred_check
      _
    $region3: #{tpu_custom_call.1} parent=1 // pred_check_branch
      %14 = sbr.rel (0) target = $region5
    $region4: #{tpu_custom_call.1} parent=1 // pred_region
      %s15 = sadd.s32 0, 0
      %17 = vsyncadd [#allocation4], 0
      %s18 = smul.addr %s15, 2
      %s19 = smul.addr %s18, 8
      %s20 = scalar_lea.hbm %s0, %s19
      %s22 = sshll.u32 %s20, 4
      %s23 = int_to_ptr.hbm [resolvable:$true] %s22
      %s24 = sshll.u32 [#allocation3], 4
      %s25 = int_to_ptr.vmem [resolvable:$true] %s24
      %27 = dma.hbm_to_vmem [thread:$0]  %s23, 256, %s25, [#allocation4]
    $region5: #{tpu_custom_call.1} parent=1 // pred_fallthru
      _
    // Predicated region
    $region6: #{tpu_custom_call.1} parent=1 // pred_check
      _
    $region7: #{tpu_custom_call.1} parent=1 // pred_check_branch
      %29 = sbr.rel (0) target = $region9
    $region8: #{tpu_custom_call.1} parent=1 // pred_region
      %s30 = sadd.s32 0, 0
      %32 = vsyncadd [#allocation7], 0
      %s33 = smul.addr %s30, 2
      %s34 = smul.addr %s33, 8
      %s35 = scalar_lea.hbm %s1, %s34
      %s37 = sshll.u32 %s35, 4
      %s38 = int_to_ptr.hbm [resolvable:$true] %s37
      %s39 = sshll.u32 [#allocation6], 4
      %s40 = int_to_ptr.vmem [resolvable:$true] %s39
      %42 = dma.hbm_to_vmem [thread:$0]  %s38, 256, %s40, [#allocation7]
    $region9: #{tpu_custom_call.1} parent=1 // pred_fallthru
      _
    // Predicated region
    $region10: #{tpu_custom_call.1} parent=1 // pred_check
      _
    $region11: #{tpu_custom_call.1} parent=1 // pred_check_branch
      %44 = sbr.rel (0) target = $region13
    $region12: #{tpu_custom_call.1} parent=1 // pred_region
      %s45 = sadd.s32 0, 0
      %47 = vsyncadd [#allocation7], 0
      %s48 = smul.addr %s45, 2
      %s49 = smul.addr %s48, 8
      %s50 = scalar_lea.hbm %s2, %s49
      %s52 = sshll.u32 %s50, 4
      %s53 = int_to_ptr.hbm [resolvable:$true] %s52
      %s54 = sshll.u32 [#allocation8], 4
      %s55 = int_to_ptr.vmem [resolvable:$true] %s54
      %57 = dma.hbm_to_vmem [thread:$0]  %s53, 256, %s55, [#allocation7]
    $region13: #{tpu_custom_call.1} parent=1 // pred_fallthru
      _
    // Predicated region
    $region14: #{tpu_custom_call.1} parent=1 // pred_check
      _
    $region15: #{tpu_custom_call.1} parent=1 // pred_check_branch
      %59 = sbr.rel (0) target = $region17
    $region16: #{tpu_custom_call.1} parent=1 // pred_region
      %s60 = sadd.s32 0, 0
      %62 = vsyncadd [#allocation10], 0
      %s63 = smul.addr %s60, 2
      %s64 = smul.addr %s63, 8
      %s65 = scalar_lea.hbm %s3, %s64
      %s67 = sshll.u32 %s65, 4
      %s68 = int_to_ptr.hbm [resolvable:$true] %s67
      %s69 = sshll.u32 [#allocation9], 4
      %s70 = int_to_ptr.vmem [resolvable:$true] %s69
      %72 = dma.hbm_to_vmem [thread:$0]  %s68, 256, %s70, [#allocation10]
    $region17: #{tpu_custom_call.1} parent=1 // pred_fallthru
      _
    // Predicated region
    $region18: #{tpu_custom_call.1} parent=1 // pred_check
      _
    $region19: #{tpu_custom_call.1} parent=1 // pred_check_branch
      %74 = sbr.rel (0) target = $region21
    $region20: #{tpu_custom_call.1} parent=1 // pred_region
      %76 = dma.done [#allocation4], 256
    $region21: #{tpu_custom_call.1} parent=1 // pred_fallthru
      _
    // Predicated region
    $region22: #{tpu_custom_call.1} parent=1 // pred_check
      _
    $region23: #{tpu_custom_call.1} parent=1 // pred_check_branch
      %78 = sbr.rel (0) target = $region25
    $region24: #{tpu_custom_call.1} parent=1 // pred_region
      %80 = dma.done [#allocation7], 256
    $region25: #{tpu_custom_call.1} parent=1 // pred_fallthru
      _
    // Predicated region
    $region26: #{tpu_custom_call.1} parent=1 // pred_check
      _
    $region27: #{tpu_custom_call.1} parent=1 // pred_check_branch
      %82 = sbr.rel (0) target = $region29
    $region28: #{tpu_custom_call.1} parent=1 // pred_region
      %84 = dma.done [#allocation7], 256
    $region29: #{tpu_custom_call.1} parent=1 // pred_fallthru
      _
    // Predicated region
    $region30: #{tpu_custom_call.1} parent=1 // pred_check
      _
    $region31: #{tpu_custom_call.1} parent=1 // pred_check_branch
      %86 = sbr.rel (0) target = $region33
    $region32: #{tpu_custom_call.1} parent=1 // pred_region
      %88 = dma.done [#allocation10], 256
    $region33: #{tpu_custom_call.1} parent=1 // pred_fallthru
      _
    %s89 = sadd.s32 0, 0
    %s90 = sadd.s32 0, 0
    %s91 = sadd.s32 0, 0
    %s92 = sadd.s32 0, 0
    %p93 = scmp.eq.s32.totalorder 0, 0
    // Predicated region
    $region34: #{tpu_custom_call.1} parent=1 // pred_check
      %p94 = pneg %p93
    $region35: #{tpu_custom_call.1} parent=1 // pred_check_branch
      %96 = sbr.rel (%p94) target = $region37
    $region36: #{tpu_custom_call.1} parent=1 // pred_region
      %97 = vst [vmem:[#allocation2] sm:$0xff] 0.0
      %98 = vst [vmem:[#allocation2 + $0x8] sm:$0xff] 0.0
    $region37: #{tpu_custom_call.1} parent=1 // pred_fallthru
      _
    %v99 = vld [vmem:[#allocation3] sm:$0xff]
    %v100 = vld [vmem:[#allocation3 + $0x8] sm:$0xff]
    %v101 = vld [vmem:[#allocation6] sm:$0xff]
    %v102 = vld [vmem:[#allocation6 + $0x8] sm:$0xff]
    %v103 = vld [vmem:[#allocation8] sm:$0xff]
    %v104 = vld [vmem:[#allocation8 + $0x8] sm:$0xff]
    %v105 = vld [vmem:[#allocation9] sm:$0xff]
    %v106 = vld [vmem:[#allocation9 + $0x8] sm:$0xff]
    %v107 = vadd.f32 %v99, %v101
    %v108 = vadd.f32 %v100, %v102
    %v109 = vadd.f32 %v107, %v103
    %v110 = vadd.f32 %v108, %v104
    %v111 = vadd.f32 %v109, %v105
    %v112 = vadd.f32 %v110, %v106
    %v113 = vmul.f32 %v111, 0.25
    %v114 = vmul.f32 %v112, 0.25
    %v115 = vsub.f32 %v99, %v113
    %v116 = vsub.f32 %v100, %v114
    %v117 = vmul.f32 %v115, %v115
    %v118 = vmul.f32 %v116, %v116
    %v119 = vsub.f32 %v101, %v113
    %v120 = vsub.f32 %v102, %v114
    %v121 = vmul.f32 %v119, %v119
    %v122 = vmul.f32 %v120, %v120
    %v123 = vadd.f32 %v117, %v121
    %v124 = vadd.f32 %v118, %v122
    %v125 = vsub.f32 %v103, %v113
    %v126 = vsub.f32 %v104, %v114
    %v127 = vmul.f32 %v125, %v125
    %v128 = vmul.f32 %v126, %v126
    %v129 = vadd.f32 %v123, %v127
    %v130 = vadd.f32 %v124, %v128
    %v131 = vsub.f32 %v105, %v113
    %v132 = vsub.f32 %v106, %v114
    %v133 = vmul.f32 %v131, %v131
    %v134 = vmul.f32 %v132, %v132
    %v135 = vadd.f32 %v129, %v133
    %v136 = vadd.f32 %v130, %v134
    %v137 = vld [vmem:[#allocation2] sm:$0xff]
    %v138 = vld [vmem:[#allocation2 + $0x8] sm:$0xff]
    %v139 = vadd.f32 %v137, %v135
    %v140 = vadd.f32 %v138, %v136
    %141 = vst [vmem:[#allocation2] sm:$0xff] %v139
    %142 = vst [vmem:[#allocation2 + $0x8] sm:$0xff] %v140
    // Predicated region
    $region38: #{tpu_custom_call.1} parent=1 // pred_check
      %p143 = pneg %p93
    $region39: #{tpu_custom_call.1} parent=1 // pred_check_branch
      %145 = sbr.rel (%p143) target = $region41
    $region40: #{tpu_custom_call.1} parent=1 // pred_region
      %v146 = vld [vmem:[#allocation2] sm:$0xff]
      %v147 = vld [vmem:[#allocation2 + $0x8] sm:$0xff]
      %v148 = vadd.f32 %v146, %v147
      %149 = vadd.xlane.f32.xlu0 %v148
      %v150 = vpop.xlane.xlu0 %149
      %v151 = vrot.slane %v150, 4
      %v152 = vadd.f32 %v150, %v151
      %v153 = vrot.slane %v152, 2
      %v154 = vadd.f32 %v152, %v153
      %v155 = vrot.slane %v154, 1
      %v156 = vadd.f32 %v154, %v155
      %s157 = vtos %v156
      %v158 = vstv %s157
      %159 = vst [vmem:[#allocation11] sm:$0xff] %v158
    $region41: #{tpu_custom_call.1} parent=1 // pred_fallthru
      _
    // Predicated region
    $region42: #{tpu_custom_call.1} parent=1 // pred_check
      _
    $region43: #{tpu_custom_call.1} parent=1 // pred_check_branch
      %161 = sbr.rel (0) target = $region45
    $region44: #{tpu_custom_call.1} parent=1 // pred_region
      %163 = vsyncadd [#allocation5], 0
      %s165 = sshll.u32 [#allocation11], 4
      %s166 = int_to_ptr.vmem [resolvable:$true] %s165
      %s167 = sshll.u32 %s4, 4
      %s168 = int_to_ptr.hbm [resolvable:$true] %s167
      %170 = dma.vmem_to_hbm [thread:$0]  %s166, 128, %s168, [#allocation5]
    $region45: #{tpu_custom_call.1} parent=1 // pred_fallthru
      _
    // Predicated region
    $region46: #{tpu_custom_call.1} parent=1 // pred_check
      _
    $region47: #{tpu_custom_call.1} parent=1 // pred_check_branch
      %172 = sbr.rel (0) target = $region49
    $region48: #{tpu_custom_call.1} parent=1 // pred_region
      %174 = dma.done [#allocation5], 128
    $region49: #{tpu_custom_call.1} parent=1 // pred_fallthru
      _
    %175 = vsyncpa [#allocation4], 1
    %176 = vsyncpa [#allocation7], 1
    %177 = vsyncpa [#allocation10], 1
    %178 = vsyncpa [#allocation5], 1

</llo_original>
